<compile_context>
chip_gen: v7x
topology: tpu7x:2x2x1
jax: 0.10.0
libtpu: 0.0.40
codegen_flags: <defaults>
</compile_context>

<pallas_src>
import jax
import jax.numpy as jnp
from jax.experimental import pallas as pl
from jax.experimental.pallas import tpu as pltpu

K_IN = 512      # in_features of nn.Linear(512, 10)
N_OUT = 10      # out_features


def _round_up(v, m):
    return ((v + m - 1) // m) * m


def _linear_kernel(x_ref, w_ref, b_ref, o_ref):
    # x_ref: [tm, 512] f32, w_ref: [512, 10] f32, b_ref: [1, 10] f32.
    # Plain MXU matmul with f32 accumulation; bias add on the VPU.
    acc = jnp.dot(x_ref[...], w_ref[...], preferred_element_type=jnp.float32)
    o_ref[...] = (acc + b_ref[...]).astype(o_ref.dtype)


def cnn_split2_forward(x, weight, bias, *, tm=None):
    """Pallas implementation of CNNSpilt2.forward: nn.Linear(512, 10).

    x:      [B, 512] float32
    weight: [10, 512] float32  (native PyTorch layout)
    bias:   [10]      float32
    returns [B, 10]   float32
    """
    B, K = x.shape
    N = weight.shape[0]

    # One-time tiny (~20 KiB) reshuffles of the parameters; the big x stream
    # goes into the kernel untouched (no extra HBM passes).
    w_t = weight.T.astype(jnp.float32)            # [K, N]
    b2 = bias.reshape(1, N).astype(jnp.float32)   # [1, N]

    if tm is None:
        # >= 2 grid steps when the batch allows (v7x has 2 TensorCores),
        # capped at 8192 rows: f32 x tile = 16 MiB, 32 MiB double-buffered,
        # comfortably under the 48 MiB scoped-VMEM limit set below.
        tm = min(8192, _round_up(pl.cdiv(B, 2), 8))
    tm = max(8, min(_round_up(tm, 8), _round_up(B, 8)))

    grid = (pl.cdiv(B, tm),)

    out = pl.pallas_call(
        _linear_kernel,
        out_shape=jax.ShapeDtypeStruct((B, N), jnp.float32),
        grid_spec=pltpu.PrefetchScalarGridSpec(
            num_scalar_prefetch=0,
            grid=grid,
            in_specs=[
                pl.BlockSpec((tm, K), lambda i: (i, 0)),   # x tile (pipelined)
                pl.BlockSpec((K, N), lambda i: (0, 0)),    # weight, VMEM-resident
                pl.BlockSpec((1, N), lambda i: (0, 0)),    # bias, VMEM-resident
            ],
            out_specs=pl.BlockSpec((tm, N), lambda i: (i, 0)),
        ),
        compiler_params=pltpu.CompilerParams(
            # Batch axis is embarrassingly parallel; lets Mosaic shard it
            # across v7x's 2 TensorCores (no-op on v5e/v6e).
            dimension_semantics=("parallel",),
            # Room for the 8192-row f32 double buffer; safe on v5e/v6e/v7x.
            vmem_limit_bytes=48 * 1024 * 1024,
        ),
    )(x, w_t, b2)

    return out


def init_params(key):
    # Match PyTorch nn.Linear default init: U(-1/sqrt(in), +1/sqrt(in)).
    in_features, out_features = K_IN, N_OUT
    k_w, k_b = jax.random.split(key)
    bound = 1.0 / jnp.sqrt(jnp.float32(in_features))
    weight = jax.random.uniform(
        k_w, (out_features, in_features), jnp.float32, minval=-bound, maxval=bound
    )
    bias = jax.random.uniform(
        k_b, (out_features,), jnp.float32, minval=-bound, maxval=bound
    )
    return weight, bias


if __name__ == "__main__":
    key = jax.random.PRNGKey(0)
    k_x, k_p = jax.random.split(key)

    B = 8
    x = jax.random.normal(k_x, (B, K_IN), jnp.float32)
    weight, bias = init_params(k_p)

    out = cnn_split2_forward(x, weight, bias)
    jax.block_until_ready(out)

    # Sanity check against the plain-JAX reference of the PyTorch semantics.
    ref = x @ weight.T + bias
    assert out.shape == (B, N_OUT)
    assert jnp.allclose(out, ref, atol=1e-2, rtol=1e-2)

    print("KERNEL_OK")
</pallas_src>

<mosaic_0001>
module attributes {stable_mosaic.version = 11 : i64} {
  func.func @_linear_kernel(%arg0: i32, %arg1: memref<8x512xf32, #tpu.memory_space<vmem>>, %arg2: memref<512x10xf32, #tpu.memory_space<vmem>>, %arg3: memref<1x10xf32, #tpu.memory_space<vmem>>, %arg4: memref<8x10xf32, #tpu.memory_space<vmem>>) attributes {dimension_semantics = [#tpu.dimension_semantics<parallel>], iteration_bounds = array<i64: 1>, scalar_prefetch = 0 : i64, scratch_operands = 0 : i64, tpu.core_type = #tpu.core_type<tc>, window_params = [{transform_indices = @transform_0, window_bounds = array<i64: 8, 512>}, {pipeline_mode = #tpu.pipeline_mode<synchronous>, transform_indices = @transform_1, window_bounds = array<i64: 512, 10>}, {pipeline_mode = #tpu.pipeline_mode<synchronous>, transform_indices = @transform_2, window_bounds = array<i64: 1, 10>}, {transform_indices = @transform_3, window_bounds = array<i64: 8, 10>}]} {
    %c0 = arith.constant 0 : index
    %c0_0 = arith.constant 0 : index
    %0 = vector.load %arg1[%c0, %c0_0] : memref<8x512xf32, #tpu.memory_space<vmem>>, vector<8x512xf32>
    %c0_1 = arith.constant 0 : index
    %c0_2 = arith.constant 0 : index
    %1 = vector.load %arg2[%c0_1, %c0_2] : memref<512x10xf32, #tpu.memory_space<vmem>>, vector<512x10xf32>
    %cst = arith.constant dense<0.000000e+00> : vector<8x10xf32>
    %2 = tpu.matmul %0, %1, %cst {dimension_numbers = #tpu.dot_dimension_numbers<[1], [0], [0], [1], [0, 0, 1, 1], [], []>} : vector<8x512xf32>, vector<512x10xf32>, vector<8x10xf32> -> vector<8x10xf32>
    %c0_3 = arith.constant 0 : index
    %c0_4 = arith.constant 0 : index
    %3 = vector.load %arg3[%c0_3, %c0_4] : memref<1x10xf32, #tpu.memory_space<vmem>>, vector<1x10xf32>
    %4 = vector.broadcast %3 : vector<1x10xf32> to vector<8x10xf32>
    %5 = arith.addf %2, %4 : vector<8x10xf32>
    %c0_5 = arith.constant 0 : index
    %c0_6 = arith.constant 0 : index
    %6 = vector.load %arg4[%c0_5, %c0_6] : memref<8x10xf32, #tpu.memory_space<vmem>>, vector<8x10xf32>
    tpu.vector_store %arg4[%c0_5, %c0_6], %5 {strides = array<i32>} : memref<8x10xf32, #tpu.memory_space<vmem>>, vector<8x10xf32>,
    return
  }
  func.func @transform_0(%arg0: i32) -> (i32, i32) {
    %c0_i32 = arith.constant 0 : i32
    %c0_i32_0 = arith.constant 0 : i32
    return %arg0, %c0_i32 : i32, i32
  }
  func.func @transform_1(%arg0: i32) -> (i32, i32) {
    %c0_i32 = arith.constant 0 : i32
    %c0_i32_0 = arith.constant 0 : i32
    %c0_i32_1 = arith.constant 0 : i32
    return %c0_i32, %c0_i32_0 : i32, i32
  }
  func.func @transform_2(%arg0: i32) -> (i32, i32) {
    %c0_i32 = arith.constant 0 : i32
    %c0_i32_0 = arith.constant 0 : i32
    %c0_i32_1 = arith.constant 0 : i32
    return %c0_i32, %c0_i32_0 : i32, i32
  }
  func.func @transform_3(%arg0: i32) -> (i32, i32) {
    %c0_i32 = arith.constant 0 : i32
    %c0_i32_0 = arith.constant 0 : i32
    return %arg0, %c0_i32 : i32, i32
  }
}

</mosaic_0001>

<llo_original>
// kernel: tpu_custom_call.1
$region0: #{tpu_custom_call.1}
  #allocation0 [shape = 'u32[]', space=smem, size = 0x4, offset = 0x4, fixed_abs, tag = 'smem constant byte address 0x4 - core index']
  #allocation1 [shape = 'u32[144,128]{1,0:T(1,128)}', space=vmem, size = 0x12000, scoped, tag = 'internal scratch']
  %s0 = inlined_call_operand.vmem [shape: f32[8,512], index: 0, kind: input, shape index: {}]
  %s1 = inlined_call_operand.vmem [shape: f32[512,10], index: 1, kind: input, shape index: {}]
  %s2 = inlined_call_operand.vmem [shape: f32[1,10], index: 2, kind: input, shape index: {}]
  %s3 = inlined_call_operand.hbm [shape: f32[8,10], index: 3, kind: output, shape index: {}]
  %s4 = sld [smem:[#allocation0]]
  $region22: #{tpu_custom_call.1} parent=0
    _
  %s6 = ssub.s32 1, %s4
  %s7 = scalar_select 0, %s6, %s4
  $region1: #{tpu_custom_call.1} parent=0
    #allocation2 [shape = 'u8[4096]{0}', space=vmem, size = 0x1000, scoped, tag = 'output window, operand 0, single buffered']
    #allocation3 [shape = 's32[1]{0}', space=sflag, size = 0x4, scoped, tag = 'scoped memory for tpu_custom_call.1']
    %8 = vsyncpa [#allocation3], 0
    // Predicated region
    $region2: #{tpu_custom_call.1} parent=1 // pred_check
      _
    $region3: #{tpu_custom_call.1} parent=1 // pred_check_branch
      %10 = sbr.rel (0) target = $region5
    $region4: #{tpu_custom_call.1} parent=1 // pred_region
      _
    $region5: #{tpu_custom_call.1} parent=1 // pred_fallthru
      _
    // Predicated region
    $region6: #{tpu_custom_call.1} parent=1 // pred_check
      _
    $region7: #{tpu_custom_call.1} parent=1 // pred_check_branch
      %12 = sbr.rel (0) target = $region9
    $region8: #{tpu_custom_call.1} parent=1 // pred_region
      _
    $region9: #{tpu_custom_call.1} parent=1 // pred_fallthru
      _
    // Predicated region
    $region10: #{tpu_custom_call.1} parent=1 // pred_check
      _
    $region11: #{tpu_custom_call.1} parent=1 // pred_check_branch
      %14 = sbr.rel (0) target = $region13
    $region12: #{tpu_custom_call.1} parent=1 // pred_region
      _
    $region13: #{tpu_custom_call.1} parent=1 // pred_fallthru
      _
    %v15 = vld [vmem:[%s0] sm:$0xff]
    %v16 = vld [vmem:[%s0 + $0x8] sm:$0xff]
    %v17 = vld [vmem:[%s0 + $0x10] sm:$0xff]
    %v18 = vld [vmem:[%s0 + $0x18] sm:$0xff]
    %v19 = vld [vmem:[%s1] sm:$0xff]
    %v20 = vld [vmem:[%s1 + $0x8] sm:$0xff]
    %v21 = vld [vmem:[%s1 + $0x10] sm:$0xff]
    %v22 = vld [vmem:[%s1 + $0x18] sm:$0xff]
    %v23 = vld [vmem:[%s1 + $0x20] sm:$0xff]
    %v24 = vld [vmem:[%s1 + $0x28] sm:$0xff]
    %v25 = vld [vmem:[%s1 + $0x30] sm:$0xff]
    %v26 = vld [vmem:[%s1 + $0x38] sm:$0xff]
    %v27 = vld [vmem:[%s1 + $0x40] sm:$0xff]
    %v28 = vld [vmem:[%s1 + $0x48] sm:$0xff]
    %v29 = vld [vmem:[%s1 + $0x50] sm:$0xff]
    %v30 = vld [vmem:[%s1 + $0x58] sm:$0xff]
    %v31 = vld [vmem:[%s1 + $0x60] sm:$0xff]
    %v32 = vld [vmem:[%s1 + $0x68] sm:$0xff]
    %v33 = vld [vmem:[%s1 + $0x70] sm:$0xff]
    %v34 = vld [vmem:[%s1 + $0x78] sm:$0xff]
    %v35 = vld [vmem:[%s1 + $0x80] sm:$0xff]
    %v36 = vld [vmem:[%s1 + $0x88] sm:$0xff]
    %v37 = vld [vmem:[%s1 + $0x90] sm:$0xff]
    %v38 = vld [vmem:[%s1 + $0x98] sm:$0xff]
    %v39 = vld [vmem:[%s1 + $0xa0] sm:$0xff]
    %v40 = vld [vmem:[%s1 + $0xa8] sm:$0xff]
    %v41 = vld [vmem:[%s1 + $0xb0] sm:$0xff]
    %v42 = vld [vmem:[%s1 + $0xb8] sm:$0xff]
    %v43 = vld [vmem:[%s1 + $0xc0] sm:$0xff]
    %v44 = vld [vmem:[%s1 + $0xc8] sm:$0xff]
    %v45 = vld [vmem:[%s1 + $0xd0] sm:$0xff]
    %v46 = vld [vmem:[%s1 + $0xd8] sm:$0xff]
    %v47 = vld [vmem:[%s1 + $0xe0] sm:$0xff]
    %v48 = vld [vmem:[%s1 + $0xe8] sm:$0xff]
    %v49 = vld [vmem:[%s1 + $0xf0] sm:$0xff]
    %v50 = vld [vmem:[%s1 + $0xf8] sm:$0xff]
    %v51 = vld [vmem:[%s1 + $0x100] sm:$0xff]
    %v52 = vld [vmem:[%s1 + $0x108] sm:$0xff]
    %v53 = vld [vmem:[%s1 + $0x110] sm:$0xff]
    %v54 = vld [vmem:[%s1 + $0x118] sm:$0xff]
    %v55 = vld [vmem:[%s1 + $0x120] sm:$0xff]
    %v56 = vld [vmem:[%s1 + $0x128] sm:$0xff]
    %v57 = vld [vmem:[%s1 + $0x130] sm:$0xff]
    %v58 = vld [vmem:[%s1 + $0x138] sm:$0xff]
    %v59 = vld [vmem:[%s1 + $0x140] sm:$0xff]
    %v60 = vld [vmem:[%s1 + $0x148] sm:$0xff]
    %v61 = vld [vmem:[%s1 + $0x150] sm:$0xff]
    %v62 = vld [vmem:[%s1 + $0x158] sm:$0xff]
    %v63 = vld [vmem:[%s1 + $0x160] sm:$0xff]
    %v64 = vld [vmem:[%s1 + $0x168] sm:$0xff]
    %v65 = vld [vmem:[%s1 + $0x170] sm:$0xff]
    %v66 = vld [vmem:[%s1 + $0x178] sm:$0xff]
    %v67 = vld [vmem:[%s1 + $0x180] sm:$0xff]
    %v68 = vld [vmem:[%s1 + $0x188] sm:$0xff]
    %v69 = vld [vmem:[%s1 + $0x190] sm:$0xff]
    %v70 = vld [vmem:[%s1 + $0x198] sm:$0xff]
    %v71 = vld [vmem:[%s1 + $0x1a0] sm:$0xff]
    %v72 = vld [vmem:[%s1 + $0x1a8] sm:$0xff]
    %v73 = vld [vmem:[%s1 + $0x1b0] sm:$0xff]
    %v74 = vld [vmem:[%s1 + $0x1b8] sm:$0xff]
    %v75 = vld [vmem:[%s1 + $0x1c0] sm:$0xff]
    %v76 = vld [vmem:[%s1 + $0x1c8] sm:$0xff]
    %v77 = vld [vmem:[%s1 + $0x1d0] sm:$0xff]
    %v78 = vld [vmem:[%s1 + $0x1d8] sm:$0xff]
    %v79 = vld [vmem:[%s1 + $0x1e0] sm:$0xff]
    %v80 = vld [vmem:[%s1 + $0x1e8] sm:$0xff]
    %v81 = vld [vmem:[%s1 + $0x1f0] sm:$0xff]
    %v82 = vld [vmem:[%s1 + $0x1f8] sm:$0xff]
    %v83 = vld [vmem:[%s2] sm:$0x1]
    %v85 = vlaneseq
    %v86 = vshrl.u32 %v85, 7
    %v87 = vsub.s32 0, %v86
    %v88 = vrot.slane %v83, %v87
    %90 = vmatprep.subr.mxu0 0.0
    %91 = vmatpush1.msra.mxu0 %v19
    %92 = vmatprep.subr.mxu0 0.0
    %93 = vmatpush1.msra.mxu0 %v20
    %94 = vmatprep.subr.mxu0 0.0
    %95 = vmatpush1.msra.mxu0 %v21
    %96 = vmatprep.subr.mxu0 0.0
    %97 = vmatpush1.msra.mxu0 %v22
    %98 = vmatprep.subr.mxu0 0.0
    %99 = vmatpush1.msra.mxu0 %v23
    %100 = vmatprep.subr.mxu0 0.0
    %101 = vmatpush1.msra.mxu0 %v24
    %102 = vmatprep.subr.mxu0 0.0
    %103 = vmatpush1.msra.mxu0 %v25
    %104 = vmatprep.subr.mxu0 0.0
    %105 = vmatpush1.msra.mxu0 %v26
    %106 = vmatprep.subr.mxu0 0.0
    %107 = vmatpush1.msra.mxu0 %v27
    %108 = vmatprep.subr.mxu0 0.0
    %109 = vmatpush1.msra.mxu0 %v28
    %110 = vmatprep.subr.mxu0 0.0
    %111 = vmatpush1.msra.mxu0 %v29
    %112 = vmatprep.subr.mxu0 0.0
    %113 = vmatpush1.msra.mxu0 %v30
    %114 = vmatprep.subr.mxu0 0.0
    %115 = vmatpush1.msra.mxu0 %v31
    %116 = vmatprep.subr.mxu0 0.0
    %117 = vmatpush1.msra.mxu0 %v32
    %118 = vmatprep.subr.mxu0 0.0
    %119 = vmatpush1.msra.mxu0 %v33
    %120 = vmatprep.subr.mxu0 0.0
    %121 = vmatpush1.msra.mxu0 %v34
    %122 = vmatprep.subr.mxu0 0.0
    %123 = vmatpush1.msra.mxu0 %v35
    %124 = vmatprep.subr.mxu0 0.0
    %125 = vmatpush1.msra.mxu0 %v36
    %126 = vmatprep.subr.mxu0 0.0
    %127 = vmatpush1.msra.mxu0 %v37
    %128 = vmatprep.subr.mxu0 0.0
    %129 = vmatpush1.msra.mxu0 %v38
    %130 = vmatprep.subr.mxu0 0.0
    %131 = vmatpush1.msra.mxu0 %v39
    %132 = vmatprep.subr.mxu0 0.0
    %133 = vmatpush1.msra.mxu0 %v40
    %134 = vmatprep.subr.mxu0 0.0
    %135 = vmatpush1.msra.mxu0 %v41
    %136 = vmatprep.subr.mxu0 0.0
    %137 = vmatpush1.msra.mxu0 %v42
    %138 = vmatprep.subr.mxu0 0.0
    %139 = vmatpush1.msra.mxu0 %v43
    %140 = vmatprep.subr.mxu0 0.0
    %141 = vmatpush1.msra.mxu0 %v44
    %142 = vmatprep.subr.mxu0 0.0
    %143 = vmatpush1.msra.mxu0 %v45
    %144 = vmatprep.subr.mxu0 0.0
    %145 = vmatpush1.msra.mxu0 %v46
    %146 = vmatprep.subr.mxu0 0.0
    %147 = vmatpush1.msra.mxu0 %v47
    %148 = vmatprep.subr.mxu0 0.0
    %149 = vmatpush1.msra.mxu0 %v48
    %150 = vmatprep.subr.mxu0 0.0
    %151 = vmatpush1.msra.mxu0 %v49
    %152 = vmatprep.subr.mxu0 0.0
    %153 = vmatpush1.msra.mxu0 %v50
    %154 = vmatprep.mubr.f32.mxu0 %v16
    %155 = vmatmul.mubr.f32.gmra.mrb[0].mxu0 %v15
    %v156 = vpop.f32.mrb[0].mxu0
    %v157 = vadd.f32 %v88, %v156
    %v158 = vpop.f32.mrb[0].mxu0
    %159 = vdwg.mxu0
    %160 = vmatprep.subr.mxu0 0.0
    %161 = vmatpush1.msra.mxu0 %v51
    %162 = vmatprep.subr.mxu0 0.0
    %163 = vmatpush1.msra.mxu0 %v52
    %164 = vmatprep.subr.mxu0 0.0
    %165 = vmatpush1.msra.mxu0 %v53
    %166 = vmatprep.subr.mxu0 0.0
    %167 = vmatpush1.msra.mxu0 %v54
    %168 = vmatprep.subr.mxu0 0.0
    %169 = vmatpush1.msra.mxu0 %v55
    %170 = vmatprep.subr.mxu0 0.0
    %171 = vmatpush1.msra.mxu0 %v56
    %172 = vmatprep.subr.mxu0 0.0
    %173 = vmatpush1.msra.mxu0 %v57
    %174 = vmatprep.subr.mxu0 0.0
    %175 = vmatpush1.msra.mxu0 %v58
    %176 = vmatprep.subr.mxu0 0.0
    %177 = vmatpush1.msra.mxu0 %v59
    %178 = vmatprep.subr.mxu0 0.0
    %179 = vmatpush1.msra.mxu0 %v60
    %180 = vmatprep.subr.mxu0 0.0
    %181 = vmatpush1.msra.mxu0 %v61
    %182 = vmatprep.subr.mxu0 0.0
    %183 = vmatpush1.msra.mxu0 %v62
    %184 = vmatprep.subr.mxu0 0.0
    %185 = vmatpush1.msra.mxu0 %v63
    %186 = vmatprep.subr.mxu0 0.0
    %187 = vmatpush1.msra.mxu0 %v64
    %188 = vmatprep.subr.mxu0 0.0
    %189 = vmatpush1.msra.mxu0 %v65
    %190 = vmatprep.subr.mxu0 0.0
    %191 = vmatpush1.msra.mxu0 %v66
    %192 = vmatprep.subr.mxu0 0.0
    %193 = vmatpush1.msra.mxu0 %v67
    %194 = vmatprep.subr.mxu0 0.0
    %195 = vmatpush1.msra.mxu0 %v68
    %196 = vmatprep.subr.mxu0 0.0
    %197 = vmatpush1.msra.mxu0 %v69
    %198 = vmatprep.subr.mxu0 0.0
    %199 = vmatpush1.msra.mxu0 %v70
    %200 = vmatprep.subr.mxu0 0.0
    %201 = vmatpush1.msra.mxu0 %v71
    %202 = vmatprep.subr.mxu0 0.0
    %203 = vmatpush1.msra.mxu0 %v72
    %204 = vmatprep.subr.mxu0 0.0
    %205 = vmatpush1.msra.mxu0 %v73
    %206 = vmatprep.subr.mxu0 0.0
    %207 = vmatpush1.msra.mxu0 %v74
    %208 = vmatprep.subr.mxu0 0.0
    %209 = vmatpush1.msra.mxu0 %v75
    %210 = vmatprep.subr.mxu0 0.0
    %211 = vmatpush1.msra.mxu0 %v76
    %212 = vmatprep.subr.mxu0 0.0
    %213 = vmatpush1.msra.mxu0 %v77
    %214 = vmatprep.subr.mxu0 0.0
    %215 = vmatpush1.msra.mxu0 %v78
    %216 = vmatprep.subr.mxu0 0.0
    %217 = vmatpush1.msra.mxu0 %v79
    %218 = vmatprep.subr.mxu0 0.0
    %219 = vmatpush1.msra.mxu0 %v80
    %220 = vmatprep.subr.mxu0 0.0
    %221 = vmatpush1.msra.mxu0 %v81
    %222 = vmatprep.subr.mxu0 0.0
    %223 = vmatpush1.msra.mxu0 %v82
    %224 = vmatprep.mubr.f32.mxu0 %v18
    %225 = vmatmul.mubr.f32.gmra.mrb[0].mxu0 %v17
    %v226 = vpop.f32.mrb[0].mxu0
    %v227 = vadd.f32 %v157, %v226
    %v228 = vpop.f32.mrb[0].mxu0
    %229 = vdwg.mxu0
    %vm230 = vcmask 80896
    %231 = vst.msk [vmem:[#allocation2] sm:$0xff] %vm230, %v227
    // Predicated region
    $region14: #{tpu_custom_call.1} parent=1 // pred_check
      _
    $region15: #{tpu_custom_call.1} parent=1 // pred_check_branch
      %233 = sbr.rel (0) target = $region17
    $region16: #{tpu_custom_call.1} parent=1 // pred_region
      %s235 = ssub.s32 128, 128
      %236 = vsyncadd [#allocation3], %s235
      %s238 = sshll.u32 [#allocation2], 4
      %s239 = int_to_ptr.vmem [resolvable:$true] %s238
      %241 = dma.vmem_to_hbm [thread:$0]  %s239, 128, %s3, [#allocation3]
    $region17: #{tpu_custom_call.1} parent=1 // pred_fallthru
      _
    // Predicated region
    $region18: #{tpu_custom_call.1} parent=1 // pred_check
      _
    $region19: #{tpu_custom_call.1} parent=1 // pred_check_branch
      %243 = sbr.rel (0) target = $region21
    $region20: #{tpu_custom_call.1} parent=1 // pred_region
      %244 = dma.done [#allocation3], 128
    $region21: #{tpu_custom_call.1} parent=1 // pred_fallthru
      _
    %245 = vsyncpa [#allocation3], 1

</llo_original>
